<compile_context>
chip_gen: v7x
topology: tpu7x:2x2x1
jax: 0.10.0
libtpu: 0.0.40
codegen_flags: <defaults>
</compile_context>

<pallas_src>
import jax
import jax.numpy as jnp
from jax.experimental import pallas as pl
from jax.experimental.pallas import tpu as pltpu

OUT_PAD = 128  # lane-dense padded width for the 10-way head


def nima_kernel(x_ref, wb_ref, bb_ref, wh_ref, bh_ref, o_ref):
    # x_ref : (TN, C, HW)   TN samples, NCHW layout with spatial flattened on lanes
    # wb_ref: (C,  F)       1x1-conv weight (base model)
    # bb_ref: (1,  F)       1x1-conv bias
    # wh_ref: (F, OUT_PAD)  head Linear weight, zero-padded beyond column 10
    # bh_ref: (1, OUT_PAD)  head Linear bias, -1e30 beyond column 10
    # o_ref : (TN, OUT_PAD) softmax distribution (padded lanes are exactly 0)

    # Global average pool FIRST (exact: base model is linear up to the pool).
    pooled = jnp.mean(x_ref[...], axis=2)                              # (TN, C)

    # base_model 1x1 conv on the pooled features.
    feat = jnp.dot(pooled, wb_ref[...],
                   preferred_element_type=jnp.float32) + bb_ref[...]   # (TN, F)

    # head: ReLU -> Dropout(identity at inference) -> Linear -> Softmax
    h = jnp.maximum(feat, 0.0)
    logits = jnp.dot(h, wh_ref[...],
                     preferred_element_type=jnp.float32) + bh_ref[...]  # (TN, OUT_PAD)

    m = jnp.max(logits, axis=1, keepdims=True)
    e = jnp.exp(logits - m)            # padded columns: exp(-1e30 - m) == 0
    o_ref[...] = (e / jnp.sum(e, axis=1, keepdims=True)).astype(o_ref.dtype)


def _pick_batch_tile(n):
    # Prefer MXU-row-filling, sublane-aligned tiles; fall back to one block for tiny N.
    for tn in (256, 128, 64, 32, 16, 8):
        if n % tn == 0:
            return tn
    return n


def nima_forward(x_nchw, w_base, b_base, w_head, b_head):
    """x_nchw: (N, C, H, W) float32.  Returns (N, 10) softmax scores."""
    N, C, H, W = x_nchw.shape
    F = w_base.shape[1]
    HW = H * W

    # NCHW consumed directly: reshape only (free), no transpose.
    x = x_nchw.reshape(N, C, HW)
    bb = b_base.reshape(1, F)

    # Pad the 10-wide head to 128 lanes for an unmasked, lane-dense output store.
    wh_pad = jnp.zeros((F, OUT_PAD), jnp.float32).at[:, :10].set(w_head)
    bh_pad = jnp.full((1, OUT_PAD), -1e30, jnp.float32).at[0, :10].set(b_head)

    TN = _pick_batch_tile(N)

    out = pl.pallas_call(
        nima_kernel,
        out_shape=jax.ShapeDtypeStruct((N, OUT_PAD), jnp.float32),
        grid_spec=pltpu.PrefetchScalarGridSpec(
            num_scalar_prefetch=0,
            grid=(N // TN,),
            in_specs=[
                pl.BlockSpec((TN, C, HW), lambda i: (i, 0, 0)),   # batched NCHW input
                pl.BlockSpec((C, F), lambda i: (0, 0)),           # base conv weight
                pl.BlockSpec((1, F), lambda i: (0, 0)),           # base conv bias
                pl.BlockSpec((F, OUT_PAD), lambda i: (0, 0)),     # padded head weight
                pl.BlockSpec((1, OUT_PAD), lambda i: (0, 0)),     # padded head bias
            ],
            out_specs=pl.BlockSpec((TN, OUT_PAD), lambda i: (i, 0)),
        ),
        compiler_params=pltpu.CompilerParams(
            dimension_semantics=("parallel",),
            vmem_limit_bytes=48 * 1024 * 1024,   # fits v7x's 64 MiB VMEM budget
        ),
    )(x, w_base, bb, wh_pad, bh_pad)

    return out[:, :10]


def reference_forward(x_nchw, w_base, b_base, w_head, b_head):
    """Pure-JAX reference matching the PyTorch semantics (eval mode),
    keeping the original conv-then-pool order."""
    N, C, H, W = x_nchw.shape
    x = jnp.transpose(x_nchw, (0, 2, 3, 1)).reshape(N, H * W, C)
    feat = jnp.einsum("npc,cf->npf", x, w_base) + b_base          # 1x1 conv
    pooled = jnp.mean(feat, axis=1)                               # global avg pool
    h = jax.nn.relu(pooled)                                       # ReLU (dropout = id)
    logits = h @ w_head + b_head                                  # Linear(F, 10)
    return jax.nn.softmax(logits, axis=1)                         # Softmax(dim=1)


if __name__ == "__main__":
    key = jax.random.PRNGKey(0)
    N, C, H, W = 2, 4, 16, 16          # small NCHW input
    F = 32                             # input_features of the head

    k1, k2, k3, k4, k5 = jax.random.split(key, 5)
    x = jax.random.normal(k1, (N, C, H, W), dtype=jnp.float32)
    w_base = jax.random.normal(k2, (C, F), dtype=jnp.float32) * 0.1
    b_base = jax.random.normal(k3, (F,), dtype=jnp.float32) * 0.1
    w_head = jax.random.normal(k4, (F, 10), dtype=jnp.float32) * 0.1
    b_head = jax.random.normal(k5, (10,), dtype=jnp.float32) * 0.1

    out = nima_forward(x, w_base, b_base, w_head, b_head)
    out = jax.block_until_ready(out)

    ref = reference_forward(x, w_base, b_base, w_head, b_head)
    assert out.shape == (N, 10)
    assert jnp.allclose(jnp.sum(out, axis=1), 1.0, atol=1e-5)
    assert jnp.allclose(out, ref, atol=1e-5, rtol=1e-5)

    print("KERNEL_OK")
</pallas_src>

<mosaic_0001>
module attributes {stable_mosaic.version = 11 : i64} {
  func.func @nima_kernel(%arg0: i32, %arg1: memref<2x4x256xf32, #tpu.memory_space<vmem>>, %arg2: memref<4x32xf32, #tpu.memory_space<vmem>>, %arg3: memref<1x32xf32, #tpu.memory_space<vmem>>, %arg4: memref<32x128xf32, #tpu.memory_space<vmem>>, %arg5: memref<1x128xf32, #tpu.memory_space<vmem>>, %arg6: memref<2x128xf32, #tpu.memory_space<vmem>>) attributes {dimension_semantics = [#tpu.dimension_semantics<parallel>], iteration_bounds = array<i64: 1>, scalar_prefetch = 0 : i64, scratch_operands = 0 : i64, tpu.core_type = #tpu.core_type<tc>, window_params = [{transform_indices = @transform_0, window_bounds = array<i64: 2, 4, 256>}, {pipeline_mode = #tpu.pipeline_mode<synchronous>, transform_indices = @transform_1, window_bounds = array<i64: 4, 32>}, {pipeline_mode = #tpu.pipeline_mode<synchronous>, transform_indices = @transform_2, window_bounds = array<i64: 1, 32>}, {pipeline_mode = #tpu.pipeline_mode<synchronous>, transform_indices = @transform_3, window_bounds = array<i64: 32, 128>}, {pipeline_mode = #tpu.pipeline_mode<synchronous>, transform_indices = @transform_4, window_bounds = array<i64: 1, 128>}, {transform_indices = @transform_5, window_bounds = array<i64: 2, 128>}]} {
    %c0 = arith.constant 0 : index
    %c0_0 = arith.constant 0 : index
    %c0_1 = arith.constant 0 : index
    %0 = vector.load %arg1[%c0, %c0_0, %c0_1] : memref<2x4x256xf32, #tpu.memory_space<vmem>>, vector<2x4x256xf32>
    %cst = arith.constant dense<0.000000e+00> : vector<2x4xf32>
    %1 = vector.multi_reduction <add>, %0, %cst [2] : vector<2x4x256xf32> to vector<2x4xf32>
    %cst_2 = arith.constant 2.560000e+02 : f32
    %2 = vector.broadcast %cst_2 : f32 to vector<2x4xf32>
    %3 = arith.divf %1, %2 : vector<2x4xf32>
    %c0_3 = arith.constant 0 : index
    %c0_4 = arith.constant 0 : index
    %4 = vector.load %arg2[%c0_3, %c0_4] : memref<4x32xf32, #tpu.memory_space<vmem>>, vector<4x32xf32>
    %cst_5 = arith.constant dense<0.000000e+00> : vector<2x32xf32>
    %5 = tpu.matmul %3, %4, %cst_5 {dimension_numbers = #tpu.dot_dimension_numbers<[1], [0], [0], [1], [0, 0, 1, 1], [], []>} : vector<2x4xf32>, vector<4x32xf32>, vector<2x32xf32> -> vector<2x32xf32>
    %c0_6 = arith.constant 0 : index
    %c0_7 = arith.constant 0 : index
    %6 = vector.load %arg3[%c0_6, %c0_7] : memref<1x32xf32, #tpu.memory_space<vmem>>, vector<1x32xf32>
    %7 = vector.broadcast %6 : vector<1x32xf32> to vector<2x32xf32>
    %8 = arith.addf %5, %7 : vector<2x32xf32>
    %cst_8 = arith.constant 0.000000e+00 : f32
    %9 = vector.broadcast %cst_8 : f32 to vector<2x32xf32>
    %10 = arith.maximumf %8, %9 : vector<2x32xf32>
    %c0_9 = arith.constant 0 : index
    %c0_10 = arith.constant 0 : index
    %11 = vector.load %arg4[%c0_9, %c0_10] : memref<32x128xf32, #tpu.memory_space<vmem>>, vector<32x128xf32>
    %cst_11 = arith.constant dense<0.000000e+00> : vector<2x128xf32>
    %12 = tpu.matmul %10, %11, %cst_11 {dimension_numbers = #tpu.dot_dimension_numbers<[1], [0], [0], [1], [0, 0, 1, 1], [], []>} : vector<2x32xf32>, vector<32x128xf32>, vector<2x128xf32> -> vector<2x128xf32>
    %c0_12 = arith.constant 0 : index
    %c0_13 = arith.constant 0 : index
    %13 = vector.load %arg5[%c0_12, %c0_13] : memref<1x128xf32, #tpu.memory_space<vmem>>, vector<1x128xf32>
    %14 = vector.broadcast %13 : vector<1x128xf32> to vector<2x128xf32>
    %15 = arith.addf %12, %14 : vector<2x128xf32>
    %cst_14 = arith.constant dense<0xFF800000> : vector<2xf32>
    %16 = vector.multi_reduction <maximumf>, %15, %cst_14 [1] : vector<2x128xf32> to vector<2xf32>
    %17 = vector.shape_cast %16 : vector<2xf32> to vector<2x1xf32>
    %18 = vector.broadcast %17 : vector<2x1xf32> to vector<2x128xf32>
    %19 = arith.subf %15, %18 : vector<2x128xf32>
    %20 = math.exp %19 : vector<2x128xf32>
    %cst_15 = arith.constant dense<0.000000e+00> : vector<2xf32>
    %21 = vector.multi_reduction <add>, %20, %cst_15 [1] : vector<2x128xf32> to vector<2xf32>
    %22 = vector.shape_cast %21 : vector<2xf32> to vector<2x1xf32>
    %23 = vector.broadcast %22 : vector<2x1xf32> to vector<2x128xf32>
    %24 = arith.divf %20, %23 : vector<2x128xf32>
    %c0_16 = arith.constant 0 : index
    %c0_17 = arith.constant 0 : index
    %25 = vector.load %arg6[%c0_16, %c0_17] : memref<2x128xf32, #tpu.memory_space<vmem>>, vector<2x128xf32>
    tpu.vector_store %arg6[%c0_16, %c0_17], %24 {strides = array<i32>} : memref<2x128xf32, #tpu.memory_space<vmem>>, vector<2x128xf32>,
    return
  }
  func.func @transform_0(%arg0: i32) -> (i32, i32, i32) {
    %c0_i32 = arith.constant 0 : i32
    %c0_i32_0 = arith.constant 0 : i32
    %c0_i32_1 = arith.constant 0 : i32
    return %arg0, %c0_i32, %c0_i32_0 : i32, i32, i32
  }
  func.func @transform_1(%arg0: i32) -> (i32, i32) {
    %c0_i32 = arith.constant 0 : i32
    %c0_i32_0 = arith.constant 0 : i32
    %c0_i32_1 = arith.constant 0 : i32
    return %c0_i32, %c0_i32_0 : i32, i32
  }
  func.func @transform_2(%arg0: i32) -> (i32, i32) {
    %c0_i32 = arith.constant 0 : i32
    %c0_i32_0 = arith.constant 0 : i32
    %c0_i32_1 = arith.constant 0 : i32
    return %c0_i32, %c0_i32_0 : i32, i32
  }
  func.func @transform_3(%arg0: i32) -> (i32, i32) {
    %c0_i32 = arith.constant 0 : i32
    %c0_i32_0 = arith.constant 0 : i32
    %c0_i32_1 = arith.constant 0 : i32
    return %c0_i32, %c0_i32_0 : i32, i32
  }
  func.func @transform_4(%arg0: i32) -> (i32, i32) {
    %c0_i32 = arith.constant 0 : i32
    %c0_i32_0 = arith.constant 0 : i32
    %c0_i32_1 = arith.constant 0 : i32
    return %c0_i32, %c0_i32_0 : i32, i32
  }
  func.func @transform_5(%arg0: i32) -> (i32, i32) {
    %c0_i32 = arith.constant 0 : i32
    %c0_i32_0 = arith.constant 0 : i32
    return %arg0, %c0_i32 : i32, i32
  }
}

</mosaic_0001>

<llo_original>
// kernel: tpu_custom_call.1
$region0: #{tpu_custom_call.1}
  #allocation0 [shape = 'u32[]', space=smem, size = 0x4, offset = 0x4, fixed_abs, tag = 'smem constant byte address 0x4 - core index']
  #allocation1 [shape = 'u32[144,128]{1,0:T(1,128)}', space=vmem, size = 0x12000, scoped, tag = 'internal scratch']
  %s0 = inlined_call_operand.hbm [shape: f32[2,4,256], index: 0, kind: input, shape index: {}]
  %s1 = inlined_call_operand.hbm [shape: f32[4,32], index: 1, kind: input, shape index: {}]
  %s2 = inlined_call_operand.vmem [shape: f32[1,32], index: 2, kind: input, shape index: {}]
  %s3 = inlined_call_operand.hbm [shape: f32[32,128], index: 3, kind: input, shape index: {}]
  %s4 = inlined_call_operand.vmem [shape: f32[1,128], index: 4, kind: input, shape index: {}]
  %s5 = inlined_call_operand.hbm [shape: f32[2,128], index: 5, kind: output, shape index: {}]
  %s6 = sld [smem:[#allocation0]]
  $region42: #{tpu_custom_call.1} parent=0
    _
  %s8 = ssub.s32 1, %s6
  %s9 = scalar_select 0, %s8, %s6
  $region1: #{tpu_custom_call.1} parent=0
    #allocation2 [shape = 'u8[8192]{0}', space=vmem, size = 0x2000, scoped, tag = 'input window, operand 0, single buffered']
    #allocation3 [shape = 's32[1]{0}', space=sflag, size = 0x4, scoped, tag = 'scoped memory for tpu_custom_call.1']
    #allocation4 [shape = 's32[1]{0}', space=sflag, size = 0x4, scoped, tag = 'scoped memory for tpu_custom_call.1']
    #allocation5 [shape = 'u8[2048]{0}', space=vmem, size = 0x800, scoped, tag = 'input window, operand 1, single buffered']
    #allocation6 [shape = 's32[1]{0}', space=sflag, size = 0x4, scoped, tag = 'scoped memory for tpu_custom_call.1']
    #allocation7 [shape = 'u8[16384]{0}', space=vmem, size = 0x4000, scoped, tag = 'input window, operand 3, single buffered']
    #allocation8 [shape = 'u8[1024]{0}', space=vmem, size = 0x400, scoped, tag = 'output window, operand 0, single buffered']
    %10 = vsyncpa [#allocation3], 0
    %11 = vsyncpa [#allocation6], 0
    %12 = vsyncpa [#allocation4], 0
    // Predicated region
    $region2: #{tpu_custom_call.1} parent=1 // pred_check
      _
    $region3: #{tpu_custom_call.1} parent=1 // pred_check_branch
      %14 = sbr.rel (0) target = $region5
    $region4: #{tpu_custom_call.1} parent=1 // pred_region
      %s16 = ssub.s32 256, 256
      %17 = vsyncadd [#allocation3], %s16
      %s18 = sshll.u32 [#allocation2], 4
      %s19 = int_to_ptr.vmem [resolvable:$true] %s18
      %24 = dma.hbm_to_vmem [thread:$0]  %s0, 256, %s19, [#allocation3], 128, 128, 8
    $region5: #{tpu_custom_call.1} parent=1 // pred_fallthru
      _
    // Predicated region
    $region6: #{tpu_custom_call.1} parent=1 // pred_check
      _
    $region7: #{tpu_custom_call.1} parent=1 // pred_check_branch
      %26 = sbr.rel (0) target = $region9
    $region8: #{tpu_custom_call.1} parent=1 // pred_region
      %s28 = ssub.s32 64, 64
      %29 = vsyncadd [#allocation6], %s28
      %s31 = sshll.u32 [#allocation5], 4
      %s32 = int_to_ptr.vmem [resolvable:$true] %s31
      %34 = dma.hbm_to_vmem [thread:$0]  %s1, 64, %s32, [#allocation6]
    $region9: #{tpu_custom_call.1} parent=1 // pred_fallthru
      _
    // Predicated region
    $region10: #{tpu_custom_call.1} parent=1 // pred_check
      _
    $region11: #{tpu_custom_call.1} parent=1 // pred_check_branch
      %36 = sbr.rel (0) target = $region13
    $region12: #{tpu_custom_call.1} parent=1 // pred_region
      _
    $region13: #{tpu_custom_call.1} parent=1 // pred_fallthru
      _
    // Predicated region
    $region14: #{tpu_custom_call.1} parent=1 // pred_check
      _
    $region15: #{tpu_custom_call.1} parent=1 // pred_check_branch
      %38 = sbr.rel (0) target = $region17
    $region16: #{tpu_custom_call.1} parent=1 // pred_region
      %s40 = ssub.s32 512, 512
      %41 = vsyncadd [#allocation6], %s40
      %s42 = sshll.u32 [#allocation7], 4
      %s43 = int_to_ptr.vmem [resolvable:$true] %s42
      %48 = dma.hbm_to_vmem [thread:$0]  %s3, 512, %s43, [#allocation6], 128, 128, 8
    $region17: #{tpu_custom_call.1} parent=1 // pred_fallthru
      _
    // Predicated region
    $region18: #{tpu_custom_call.1} parent=1 // pred_check
      _
    $region19: #{tpu_custom_call.1} parent=1 // pred_check_branch
      %50 = sbr.rel (0) target = $region21
    $region20: #{tpu_custom_call.1} parent=1 // pred_region
      _
    $region21: #{tpu_custom_call.1} parent=1 // pred_fallthru
      _
    // Predicated region
    $region22: #{tpu_custom_call.1} parent=1 // pred_check
      _
    $region23: #{tpu_custom_call.1} parent=1 // pred_check_branch
      %52 = sbr.rel (0) target = $region25
    $region24: #{tpu_custom_call.1} parent=1 // pred_region
      %53 = dma.done [#allocation3], 256
    $region25: #{tpu_custom_call.1} parent=1 // pred_fallthru
      _
    // Predicated region
    $region26: #{tpu_custom_call.1} parent=1 // pred_check
      _
    $region27: #{tpu_custom_call.1} parent=1 // pred_check_branch
      %55 = sbr.rel (0) target = $region29
    $region28: #{tpu_custom_call.1} parent=1 // pred_region
      %56 = dma.done [#allocation6], 64
    $region29: #{tpu_custom_call.1} parent=1 // pred_fallthru
      _
    // Predicated region
    $region30: #{tpu_custom_call.1} parent=1 // pred_check
      _
    $region31: #{tpu_custom_call.1} parent=1 // pred_check_branch
      %58 = sbr.rel (0) target = $region33
    $region32: #{tpu_custom_call.1} parent=1 // pred_region
      %59 = dma.done [#allocation6], 512
    $region33: #{tpu_custom_call.1} parent=1 // pred_fallthru
      _
    %v60 = vld [vmem:[#allocation2] sm:$0xff]
    %v61 = vld [vmem:[#allocation2 + $0x8] sm:$0xff]
    %v64 = vcombine.high %v60, %v60
    %v65 = vcombine.high %v61, %v61
    %vm68 = vcmask 1043456
    %v69 = vsel %vm68, %v60, 0.0
    %v70 = vsel %vm68, %v64, 0.0
    %v71 = vadd.f32 %v69, %v70
    %72 = vadd.xlane.f32.xlu0 %v71
    %v73 = vpop.xlane.xlu0 %72
    %v74 = vsel %vm68, %v61, 0.0
    %v75 = vsel %vm68, %v65, 0.0
    %v76 = vadd.f32 %v74, %v75
    %77 = vadd.xlane.f32.xlu0 %v76
    %v78 = vpop.xlane.xlu0 %77
    %v79 = vrcp.pop 256.0
    %v80 = vmul.f32 %v73, %v79
    %v81 = vmul.f32 %v78, %v79
    %v82 = vld [vmem:[#allocation5] sm:$0xf]
    %v83 = vld [vmem:[%s2] sm:$0x1]
    %v85 = vlaneseq
    %v86 = vshrl.u32 %v85, 7
    %v87 = vsub.s32 0, %v86
    %v88 = vrot.slane %v83, %v87
    %v92 = vlaneseq
    %v93 = vand.u32 %v92, 127
    %v94 = vlaneseq
    %v95 = vshrl.u32 %v94, 7
    %v96 = vsub.s32 %v93, %v95
    %v97 = vrot.slane %v80, %v96
    %v98 = vlaneseq
    %v99 = vshrl.u32 %v98, 7
    %v100 = vsub.s32 %v93, %v99
    %v101 = vrot.slane %v81, %v100
    %vm102 = vcmask 1041409
    %v103 = vsel %vm102, %v101, %v97
    %vm104 = vcmask 31744
    %v105 = vsel %vm104, %v103, 0
    %v108 = vsel %vm68, %v82, 0
    %110 = vmatprep.subr.mxu0 0.0
    %111 = vmatpush1.msra.mxu0 %v108
    %112 = vmatprep.subr.mxu0 0.0
    %113 = vmatpush1.msra.mxu0 0.0
    %114 = vmatprep.subr.mxu0 0.0
    %115 = vmatpush1.msra.mxu0 0.0
    %116 = vmatprep.subr.mxu0 0.0
    %117 = vmatpush1.msra.mxu0 0.0
    %118 = vmatprep.subr.mxu0 0.0
    %119 = vmatpush1.msra.mxu0 0.0
    %120 = vmatprep.subr.mxu0 0.0
    %121 = vmatpush1.msra.mxu0 0.0
    %122 = vmatprep.subr.mxu0 0.0
    %123 = vmatpush1.msra.mxu0 0.0
    %124 = vmatprep.subr.mxu0 0.0
    %125 = vmatpush1.msra.mxu0 0.0
    %126 = vmatprep.subr.mxu0 0.0
    %127 = vmatpush1.msra.mxu0 0.0
    %128 = vmatprep.subr.mxu0 0.0
    %129 = vmatpush1.msra.mxu0 0.0
    %130 = vmatprep.subr.mxu0 0.0
    %131 = vmatpush1.msra.mxu0 0.0
    %132 = vmatprep.subr.mxu0 0.0
    %133 = vmatpush1.msra.mxu0 0.0
    %134 = vmatprep.subr.mxu0 0.0
    %135 = vmatpush1.msra.mxu0 0.0
    %136 = vmatprep.subr.mxu0 0.0
    %137 = vmatpush1.msra.mxu0 0.0
    %138 = vmatprep.subr.mxu0 0.0
    %139 = vmatpush1.msra.mxu0 0.0
    %140 = vmatprep.subr.mxu0 0.0
    %141 = vmatpush1.msra.mxu0 0.0
    %142 = vmatprep.subr.mxu0 0.0
    %143 = vmatpush1.msra.mxu0 0.0
    %144 = vmatprep.subr.mxu0 0.0
    %145 = vmatpush1.msra.mxu0 0.0
    %146 = vmatprep.subr.mxu0 0.0
    %147 = vmatpush1.msra.mxu0 0.0
    %148 = vmatprep.subr.mxu0 0.0
    %149 = vmatpush1.msra.mxu0 0.0
    %150 = vmatprep.subr.mxu0 0.0
    %151 = vmatpush1.msra.mxu0 0.0
    %152 = vmatprep.subr.mxu0 0.0
    %153 = vmatpush1.msra.mxu0 0.0
    %154 = vmatprep.subr.mxu0 0.0
    %155 = vmatpush1.msra.mxu0 0.0
    %156 = vmatprep.subr.mxu0 0.0
    %157 = vmatpush1.msra.mxu0 0.0
    %158 = vmatprep.subr.mxu0 0.0
    %159 = vmatpush1.msra.mxu0 0.0
    %160 = vmatprep.subr.mxu0 0.0
    %161 = vmatpush1.msra.mxu0 0.0
    %162 = vmatprep.subr.mxu0 0.0
    %163 = vmatpush1.msra.mxu0 0.0
    %164 = vmatprep.subr.mxu0 0.0
    %165 = vmatpush1.msra.mxu0 0.0
    %166 = vmatprep.subr.mxu0 0.0
    %167 = vmatpush1.msra.mxu0 0.0
    %168 = vmatprep.subr.mxu0 0.0
    %169 = vmatpush1.msra.mxu0 0.0
    %170 = vmatprep.subr.mxu0 0.0
    %171 = vmatpush1.msra.mxu0 0.0
    %172 = vmatprep.subr.mxu0 0.0
    %173 = vmatpush1.msra.mxu0 0.0
    %174 = vmatprep.mubr.f32.mxu0 0.0
    %175 = vmatmul.mubr.f32.gmra.mrb[0].mxu0 %v105
    %v176 = vpop.f32.mrb[0].mxu0
    %v177 = vadd.f32 %v88, %v176
    %v178 = vpop.f32.mrb[0].mxu0
    %179 = vdwg.mxu0
    %v180 = vmax.f32 %v177, 0.0
    %v181 = vld [vmem:[#allocation7] sm:$0xff]
    %v182 = vld [vmem:[#allocation7 + $0x8] sm:$0xff]
    %v183 = vld [vmem:[#allocation7 + $0x10] sm:$0xff]
    %v184 = vld [vmem:[#allocation7 + $0x18] sm:$0xff]
    %v185 = vld [vmem:[%s4] sm:$0x1]
    %v187 = vlaneseq
    %v188 = vshrl.u32 %v187, 7
    %v189 = vsub.s32 0, %v188
    %v190 = vrot.slane %v185, %v189
    %vm192 = vcmask 261120
    %v194 = vsel %vm192, %v180, 0
    %196 = vmatprep.subr.mxu0 0.0
    %197 = vmatpush1.msra.mxu0 %v181
    %198 = vmatprep.subr.mxu0 0.0
    %199 = vmatpush1.msra.mxu0 %v182
    %200 = vmatprep.subr.mxu0 0.0
    %201 = vmatpush1.msra.mxu0 %v183
    %202 = vmatprep.subr.mxu0 0.0
    %203 = vmatpush1.msra.mxu0 %v184
    %204 = vmatprep.subr.mxu0 0.0
    %205 = vmatpush1.msra.mxu0 0.0
    %206 = vmatprep.subr.mxu0 0.0
    %207 = vmatpush1.msra.mxu0 0.0
    %208 = vmatprep.subr.mxu0 0.0
    %209 = vmatpush1.msra.mxu0 0.0
    %210 = vmatprep.subr.mxu0 0.0
    %211 = vmatpush1.msra.mxu0 0.0
    %212 = vmatprep.subr.mxu0 0.0
    %213 = vmatpush1.msra.mxu0 0.0
    %214 = vmatprep.subr.mxu0 0.0
    %215 = vmatpush1.msra.mxu0 0.0
    %216 = vmatprep.subr.mxu0 0.0
    %217 = vmatpush1.msra.mxu0 0.0
    %218 = vmatprep.subr.mxu0 0.0
    %219 = vmatpush1.msra.mxu0 0.0
    %220 = vmatprep.subr.mxu0 0.0
    %221 = vmatpush1.msra.mxu0 0.0
    %222 = vmatprep.subr.mxu0 0.0
    %223 = vmatpush1.msra.mxu0 0.0
    %224 = vmatprep.subr.mxu0 0.0
    %225 = vmatpush1.msra.mxu0 0.0
    %226 = vmatprep.subr.mxu0 0.0
    %227 = vmatpush1.msra.mxu0 0.0
    %228 = vmatprep.subr.mxu0 0.0
    %229 = vmatpush1.msra.mxu0 0.0
    %230 = vmatprep.subr.mxu0 0.0
    %231 = vmatpush1.msra.mxu0 0.0
    %232 = vmatprep.subr.mxu0 0.0
    %233 = vmatpush1.msra.mxu0 0.0
    %234 = vmatprep.subr.mxu0 0.0
    %235 = vmatpush1.msra.mxu0 0.0
    %236 = vmatprep.subr.mxu0 0.0
    %237 = vmatpush1.msra.mxu0 0.0
    %238 = vmatprep.subr.mxu0 0.0
    %239 = vmatpush1.msra.mxu0 0.0
    %240 = vmatprep.subr.mxu0 0.0
    %241 = vmatpush1.msra.mxu0 0.0
    %242 = vmatprep.subr.mxu0 0.0
    %243 = vmatpush1.msra.mxu0 0.0
    %244 = vmatprep.subr.mxu0 0.0
    %245 = vmatpush1.msra.mxu0 0.0
    %246 = vmatprep.subr.mxu0 0.0
    %247 = vmatpush1.msra.mxu0 0.0
    %248 = vmatprep.subr.mxu0 0.0
    %249 = vmatpush1.msra.mxu0 0.0
    %250 = vmatprep.subr.mxu0 0.0
    %251 = vmatpush1.msra.mxu0 0.0
    %252 = vmatprep.subr.mxu0 0.0
    %253 = vmatpush1.msra.mxu0 0.0
    %254 = vmatprep.subr.mxu0 0.0
    %255 = vmatpush1.msra.mxu0 0.0
    %256 = vmatprep.subr.mxu0 0.0
    %257 = vmatpush1.msra.mxu0 0.0
    %258 = vmatprep.subr.mxu0 0.0
    %259 = vmatpush1.msra.mxu0 0.0
    %260 = vmatprep.mubr.f32.mxu0 0.0
    %261 = vmatmul.mubr.f32.gmra.mrb[0].mxu0 %v194
    %v262 = vpop.f32.mrb[0].mxu0
    %v263 = vadd.f32 %v190, %v262
    %v264 = vpop.f32.mrb[0].mxu0
    %265 = vdwg.mxu0
    %vm266 = vcmask 1041408
    %v267 = vsel %vm266, %v263, -inf
    %268 = vmax.xlane.f32.xlu0 %v267
    %v269 = vpop.xlane.xlu0 %268
    %v270 = vsub.f32 %v263, %v269
    %v271 = vmul.f32 %v270, 1.442695
    %v272 = vpow.pop %v271
    %v273 = vsel %vm266, %v272, 0.0
    %274 = vadd.xlane.f32.xlu0 %v273
    %v275 = vpop.xlane.xlu0 %274
    %v276 = vrcp.pop %v275
    %v277 = vmul.f32 %v272, %v276
    %278 = vst [vmem:[#allocation8] sm:$0x3] %v277
    // Predicated region
    $region34: #{tpu_custom_call.1} parent=1 // pred_check
      _
    $region35: #{tpu_custom_call.1} parent=1 // pred_check_branch
      %280 = sbr.rel (0) target = $region37
    $region36: #{tpu_custom_call.1} parent=1 // pred_region
      %s282 = ssub.s32 32, 32
      %283 = vsyncadd [#allocation4], %s282
      %s285 = sshll.u32 [#allocation8], 4
      %s286 = int_to_ptr.vmem [resolvable:$true] %s285
      %288 = dma.vmem_to_hbm [thread:$0]  %s286, 32, %s5, [#allocation4]
    $region37: #{tpu_custom_call.1} parent=1 // pred_fallthru
      _
    // Predicated region
    $region38: #{tpu_custom_call.1} parent=1 // pred_check
      _
    $region39: #{tpu_custom_call.1} parent=1 // pred_check_branch
      %290 = sbr.rel (0) target = $region41
    $region40: #{tpu_custom_call.1} parent=1 // pred_region
      %291 = dma.done [#allocation4], 32
    $region41: #{tpu_custom_call.1} parent=1 // pred_fallthru
      _
    %292 = vsyncpa [#allocation3], 1
    %293 = vsyncpa [#allocation6], 1
    %294 = vsyncpa [#allocation4], 1

</llo_original>
